<compile_context>
chip_gen: v7x
topology: tpu7x:2x2x1
jax: 0.10.0
libtpu: 0.0.40
codegen_flags: <defaults>
</compile_context>

<pallas_src>
import functools
import math

import jax
import jax.numpy as jnp
from jax.experimental import pallas as pl
from jax.experimental.pallas import tpu as pltpu


def _sep_fourier_kernel(x_ref, sinp_ref, cosp_ref, bias_ref, o_ref, *, n, cst):
    """One (R, TL) tile.

    x_ref:    (R, TL)  inputs; row r = (variable v, batch chunk s), batch on lanes
    sinp_ref: (R, N)   per-row sin coefficients (variable's row replicated SUB times)
    cosp_ref: (R, N)   per-row cos coefficients
    bias_ref: (R, 1)   per-row bias
    o_ref:    (R, TL)  output
    n:        number of harmonics (static)
    cst:      base angular frequency 2*pi/period (static python float)
    """
    x = x_ref[...]                                 # (R, TL) f32
    sinp = sinp_ref[...]                           # (R, N)
    cosp = cosp_ref[...]                           # (R, N)
    bias = bias_ref[...]                           # (R, 1)

    # Base angle: the only two transcendentals per element (EUP slot).
    theta = x * jnp.float32(cst)
    s1 = jnp.sin(theta)
    c1 = jnp.cos(theta)

    # k = 1 term.  (R, 1) coefficient columns broadcast along lanes (cheap splat).
    acc = bias + s1 * sinp[:, 0:1] + c1 * cosp[:, 0:1]

    # Higher harmonics via the angle-addition recurrence (pure VPU work).
    sk, ck = s1, c1
    for k in range(1, n):
        sk, ck = sk * c1 + ck * s1, ck * c1 - sk * s1
        acc = acc + sk * sinp[:, k:k + 1] + ck * cosp[:, k:k + 1]

    o_ref[...] = acc


def _reference(x2, sin_params, cos_params, bias, period=2.0):
    """Pure-JAX reference / small-input fallback (x2 is (B, V))."""
    N = sin_params.shape[1]
    rng = jnp.arange(1, N + 1, dtype=jnp.float32) * (2.0 * jnp.pi / period)
    xe = x2[:, :, None] * rng[None, None, :]                     # (B, V, N)
    return (jnp.sin(xe) * sin_params[None]).sum(-1) \
         + (jnp.cos(xe) * cos_params[None]).sum(-1) \
         + bias[None, :]


def _round_up(a, b):
    return ((a + b - 1) // b) * b


def separated_fourier_series(x, sin_params, cos_params, bias, period=2.0,
                             *, use_pallas=None):
    """JAX wrapper mirroring SeparatedFourierSeries.forward.

    x:          (B, V) or (V,) float32
    sin_params: (V, N) float32   (row i = sub-module i's sin_params)
    cos_params: (V, N) float32
    bias:       (V,)   float32   (sub-module i's scalar bias)
    use_pallas: None -> auto (tiny inputs use fused XLA elementwise),
                True/False to force.
    """
    x = jnp.asarray(x, jnp.float32)
    one_d = (x.ndim == 1)
    x2 = x[None, :] if one_d else x                # (B, V)
    B, V = x2.shape
    N = sin_params.shape[1]

    sinp = jnp.asarray(sin_params, jnp.float32)    # (V, N)
    cosp = jnp.asarray(cos_params, jnp.float32)    # (V, N)
    bias_v = jnp.asarray(bias, jnp.float32)        # (V,)

    if use_pallas is None:
        # A pallas_call has ~us fixed overhead; let XLA handle tiny problems.
        use_pallas = (B * V >= 1024)
    if not use_pallas:
        out = _reference(x2, sinp, cosp, bias_v, period)
        return out[0] if one_d else out

    cst = float(2.0 * jnp.pi / period)             # static: baked into the kernel

    # ---- layout: variables (x SUB batch-chunks) on sublanes, batch on lanes ----
    SUB = 8 // math.gcd(8, V)                      # rows per variable -> R % 8 == 0
    R = V * SUB
    L = -(-B // SUB)                               # lanes needed per row
    L_min = _round_up(max(L, 1), 128)

    # Lane tile: >= ~512 KiB of x per grid step for large batches (amortizes the
    # ~0.35 us/step overhead), a single 128-lane tile for small ones.
    TL = 128
    while TL < 4096 and TL < L_min and R * TL * 4 < (512 * 1024):
        TL *= 2
    L_pad = _round_up(L_min, TL)
    B_pad = SUB * L_pad

    xt = x2.T                                      # (V, B)
    if B_pad != B:
        xt = jnp.pad(xt, ((0, 0), (0, B_pad - B)))
    xr = xt.reshape(V, SUB, L_pad).reshape(R, L_pad)        # (R, L_pad)

    sinr = jnp.repeat(sinp, SUB, axis=0)           # (R, N)  row v*SUB+s = sinp[v]
    cosr = jnp.repeat(cosp, SUB, axis=0)           # (R, N)
    biasr = jnp.repeat(bias_v[:, None], SUB, axis=0)        # (R, 1)

    kernel = functools.partial(_sep_fourier_kernel, n=N, cst=cst)

    cost = pl.CostEstimate(
        flops=int(10 * N * R * L_pad),             # recurrence + accumulate
        transcendentals=int(2 * R * L_pad),        # one sin + one cos per element
        bytes_accessed=int(4 * (2 * R * L_pad + 2 * R * N + R)),
    )

    out_r = pl.pallas_call(
        kernel,
        out_shape=jax.ShapeDtypeStruct((R, L_pad), jnp.float32),
        grid=(L_pad // TL,),
        in_specs=[
            pl.BlockSpec((R, TL), lambda i: (0, i)),   # x tile, pipelined over lanes
            pl.BlockSpec((R, N), lambda i: (0, 0)),    # sin coeffs, resident
            pl.BlockSpec((R, N), lambda i: (0, 0)),    # cos coeffs, resident
            pl.BlockSpec((R, 1), lambda i: (0, 0)),    # bias, resident
        ],
        out_specs=pl.BlockSpec((R, TL), lambda i: (0, i)),
        compiler_params=pltpu.CompilerParams(
            dimension_semantics=("parallel",)),        # shard lane tiles on v7x's 2 TCs
        cost_estimate=cost,
    )(xr, sinr, cosr, biasr)

    out = out_r.reshape(V, SUB, L_pad).reshape(V, B_pad)[:, :B].T   # (B, V)
    return out[0] if one_d else out


if __name__ == "__main__":
    # Small shapes consistent with the module: batch=8, n_var=4, n=10 harmonics.
    B, V, N = 8, 4, 10
    period = 2.0

    key = jax.random.PRNGKey(0)
    kx, ks, kc, kb = jax.random.split(key, 4)

    x = jax.random.normal(kx, (B, V), dtype=jnp.float32)
    sin_params = jax.random.normal(ks, (V, N), dtype=jnp.float32)  # one (n,) vector per sub-module
    cos_params = jax.random.normal(kc, (V, N), dtype=jnp.float32)
    bias = jax.random.normal(kb, (V,), dtype=jnp.float32)          # one scalar bias per sub-module

    # Force the Pallas path for the small demo so the kernel is exercised.
    y = separated_fourier_series(x, sin_params, cos_params, bias, period,
                                 use_pallas=True)
    y = jax.block_until_ready(y)
    y_ref = _reference(x, sin_params, cos_params, bias, period)
    assert y.shape == (B, V)
    assert jnp.allclose(y, y_ref, atol=1e-4, rtol=1e-4), "mismatch vs reference (2-D)"

    # Larger batch that exercises the SUB-fold + lane padding.
    B2 = 640
    x_big = jax.random.normal(jax.random.PRNGKey(2), (B2, V), dtype=jnp.float32)
    y_big = jax.block_until_ready(
        separated_fourier_series(x_big, sin_params, cos_params, bias, period,
                                 use_pallas=True))
    assert y_big.shape == (B2, V)
    assert jnp.allclose(y_big, _reference(x_big, sin_params, cos_params, bias, period),
                        atol=1e-4, rtol=1e-4), "mismatch vs reference (large batch)"

    # 1-D input path (torch.cat branch).
    x1 = jax.random.normal(jax.random.PRNGKey(1), (V,), dtype=jnp.float32)
    y1 = jax.block_until_ready(
        separated_fourier_series(x1, sin_params, cos_params, bias, period,
                                 use_pallas=True))
    assert y1.shape == (V,)
    assert jnp.allclose(y1, _reference(x1[None, :], sin_params, cos_params, bias, period)[0],
                        atol=1e-4, rtol=1e-4), "mismatch vs reference (1-D)"

    print("KERNEL_OK")
</pallas_src>

<mosaic_0001>
module attributes {stable_mosaic.version = 11 : i64} {
  func.func @_sep_fourier_kernel(%arg0: i32, %arg1: memref<8x128xf32, #tpu.memory_space<vmem>>, %arg2: memref<8x10xf32, #tpu.memory_space<vmem>>, %arg3: memref<8x10xf32, #tpu.memory_space<vmem>>, %arg4: memref<8x1xf32, #tpu.memory_space<vmem>>, %arg5: memref<8x128xf32, #tpu.memory_space<vmem>>) attributes {dimension_semantics = [#tpu.dimension_semantics<parallel>], iteration_bounds = array<i64: 1>, scalar_prefetch = 0 : i64, scratch_operands = 0 : i64, tpu.core_type = #tpu.core_type<tc>, window_params = [{transform_indices = @transform_0, window_bounds = array<i64: 8, 128>}, {pipeline_mode = #tpu.pipeline_mode<synchronous>, transform_indices = @transform_1, window_bounds = array<i64: 8, 10>}, {pipeline_mode = #tpu.pipeline_mode<synchronous>, transform_indices = @transform_2, window_bounds = array<i64: 8, 10>}, {pipeline_mode = #tpu.pipeline_mode<synchronous>, transform_indices = @transform_3, window_bounds = array<i64: 8, 1>}, {transform_indices = @transform_4, window_bounds = array<i64: 8, 128>}]} {
    %c0 = arith.constant 0 : index
    %c0_0 = arith.constant 0 : index
    %0 = vector.load %arg1[%c0, %c0_0] : memref<8x128xf32, #tpu.memory_space<vmem>>, vector<8x128xf32>
    %c0_1 = arith.constant 0 : index
    %c0_2 = arith.constant 0 : index
    %1 = vector.load %arg2[%c0_1, %c0_2] : memref<8x10xf32, #tpu.memory_space<vmem>>, vector<8x10xf32>
    %c0_3 = arith.constant 0 : index
    %c0_4 = arith.constant 0 : index
    %2 = vector.load %arg3[%c0_3, %c0_4] : memref<8x10xf32, #tpu.memory_space<vmem>>, vector<8x10xf32>
    %c0_5 = arith.constant 0 : index
    %c0_6 = arith.constant 0 : index
    %3 = vector.load %arg4[%c0_5, %c0_6] : memref<8x1xf32, #tpu.memory_space<vmem>>, vector<8x1xf32>
    %cst = arith.constant 3.14159274 : f32
    %4 = vector.broadcast %cst : f32 to vector<8x128xf32>
    %5 = arith.mulf %0, %4 : vector<8x128xf32>
    %6 = math.sin %5 : vector<8x128xf32>
    %7 = math.cos %5 : vector<8x128xf32>
    %8 = vector.extract_strided_slice %1 {offsets = [0, 0], sizes = [8, 1], strides = [1, 1]} : vector<8x10xf32> to vector<8x1xf32>
    %9 = vector.broadcast %8 : vector<8x1xf32> to vector<8x128xf32>
    %10 = arith.mulf %6, %9 : vector<8x128xf32>
    %11 = vector.broadcast %3 : vector<8x1xf32> to vector<8x128xf32>
    %12 = arith.addf %11, %10 : vector<8x128xf32>
    %13 = vector.extract_strided_slice %2 {offsets = [0, 0], sizes = [8, 1], strides = [1, 1]} : vector<8x10xf32> to vector<8x1xf32>
    %14 = vector.broadcast %13 : vector<8x1xf32> to vector<8x128xf32>
    %15 = arith.mulf %7, %14 : vector<8x128xf32>
    %16 = arith.addf %12, %15 : vector<8x128xf32>
    %17 = arith.mulf %6, %7 : vector<8x128xf32>
    %18 = arith.mulf %7, %6 : vector<8x128xf32>
    %19 = arith.addf %17, %18 : vector<8x128xf32>
    %20 = arith.mulf %7, %7 : vector<8x128xf32>
    %21 = arith.mulf %6, %6 : vector<8x128xf32>
    %22 = arith.subf %20, %21 : vector<8x128xf32>
    %23 = vector.extract_strided_slice %1 {offsets = [0, 1], sizes = [8, 1], strides = [1, 1]} : vector<8x10xf32> to vector<8x1xf32>
    %24 = vector.broadcast %23 : vector<8x1xf32> to vector<8x128xf32>
    %25 = arith.mulf %19, %24 : vector<8x128xf32>
    %26 = arith.addf %16, %25 : vector<8x128xf32>
    %27 = vector.extract_strided_slice %2 {offsets = [0, 1], sizes = [8, 1], strides = [1, 1]} : vector<8x10xf32> to vector<8x1xf32>
    %28 = vector.broadcast %27 : vector<8x1xf32> to vector<8x128xf32>
    %29 = arith.mulf %22, %28 : vector<8x128xf32>
    %30 = arith.addf %26, %29 : vector<8x128xf32>
    %31 = arith.mulf %19, %7 : vector<8x128xf32>
    %32 = arith.mulf %22, %6 : vector<8x128xf32>
    %33 = arith.addf %31, %32 : vector<8x128xf32>
    %34 = arith.mulf %22, %7 : vector<8x128xf32>
    %35 = arith.mulf %19, %6 : vector<8x128xf32>
    %36 = arith.subf %34, %35 : vector<8x128xf32>
    %37 = vector.extract_strided_slice %1 {offsets = [0, 2], sizes = [8, 1], strides = [1, 1]} : vector<8x10xf32> to vector<8x1xf32>
    %38 = vector.broadcast %37 : vector<8x1xf32> to vector<8x128xf32>
    %39 = arith.mulf %33, %38 : vector<8x128xf32>
    %40 = arith.addf %30, %39 : vector<8x128xf32>
    %41 = vector.extract_strided_slice %2 {offsets = [0, 2], sizes = [8, 1], strides = [1, 1]} : vector<8x10xf32> to vector<8x1xf32>
    %42 = vector.broadcast %41 : vector<8x1xf32> to vector<8x128xf32>
    %43 = arith.mulf %36, %42 : vector<8x128xf32>
    %44 = arith.addf %40, %43 : vector<8x128xf32>
    %45 = arith.mulf %33, %7 : vector<8x128xf32>
    %46 = arith.mulf %36, %6 : vector<8x128xf32>
    %47 = arith.addf %45, %46 : vector<8x128xf32>
    %48 = arith.mulf %36, %7 : vector<8x128xf32>
    %49 = arith.mulf %33, %6 : vector<8x128xf32>
    %50 = arith.subf %48, %49 : vector<8x128xf32>
    %51 = vector.extract_strided_slice %1 {offsets = [0, 3], sizes = [8, 1], strides = [1, 1]} : vector<8x10xf32> to vector<8x1xf32>
    %52 = vector.broadcast %51 : vector<8x1xf32> to vector<8x128xf32>
    %53 = arith.mulf %47, %52 : vector<8x128xf32>
    %54 = arith.addf %44, %53 : vector<8x128xf32>
    %55 = vector.extract_strided_slice %2 {offsets = [0, 3], sizes = [8, 1], strides = [1, 1]} : vector<8x10xf32> to vector<8x1xf32>
    %56 = vector.broadcast %55 : vector<8x1xf32> to vector<8x128xf32>
    %57 = arith.mulf %50, %56 : vector<8x128xf32>
    %58 = arith.addf %54, %57 : vector<8x128xf32>
    %59 = arith.mulf %47, %7 : vector<8x128xf32>
    %60 = arith.mulf %50, %6 : vector<8x128xf32>
    %61 = arith.addf %59, %60 : vector<8x128xf32>
    %62 = arith.mulf %50, %7 : vector<8x128xf32>
    %63 = arith.mulf %47, %6 : vector<8x128xf32>
    %64 = arith.subf %62, %63 : vector<8x128xf32>
    %65 = vector.extract_strided_slice %1 {offsets = [0, 4], sizes = [8, 1], strides = [1, 1]} : vector<8x10xf32> to vector<8x1xf32>
    %66 = vector.broadcast %65 : vector<8x1xf32> to vector<8x128xf32>
    %67 = arith.mulf %61, %66 : vector<8x128xf32>
    %68 = arith.addf %58, %67 : vector<8x128xf32>
    %69 = vector.extract_strided_slice %2 {offsets = [0, 4], sizes = [8, 1], strides = [1, 1]} : vector<8x10xf32> to vector<8x1xf32>
    %70 = vector.broadcast %69 : vector<8x1xf32> to vector<8x128xf32>
    %71 = arith.mulf %64, %70 : vector<8x128xf32>
    %72 = arith.addf %68, %71 : vector<8x128xf32>
    %73 = arith.mulf %61, %7 : vector<8x128xf32>
    %74 = arith.mulf %64, %6 : vector<8x128xf32>
    %75 = arith.addf %73, %74 : vector<8x128xf32>
    %76 = arith.mulf %64, %7 : vector<8x128xf32>
    %77 = arith.mulf %61, %6 : vector<8x128xf32>
    %78 = arith.subf %76, %77 : vector<8x128xf32>
    %79 = vector.extract_strided_slice %1 {offsets = [0, 5], sizes = [8, 1], strides = [1, 1]} : vector<8x10xf32> to vector<8x1xf32>
    %80 = vector.broadcast %79 : vector<8x1xf32> to vector<8x128xf32>
    %81 = arith.mulf %75, %80 : vector<8x128xf32>
    %82 = arith.addf %72, %81 : vector<8x128xf32>
    %83 = vector.extract_strided_slice %2 {offsets = [0, 5], sizes = [8, 1], strides = [1, 1]} : vector<8x10xf32> to vector<8x1xf32>
    %84 = vector.broadcast %83 : vector<8x1xf32> to vector<8x128xf32>
    %85 = arith.mulf %78, %84 : vector<8x128xf32>
    %86 = arith.addf %82, %85 : vector<8x128xf32>
    %87 = arith.mulf %75, %7 : vector<8x128xf32>
    %88 = arith.mulf %78, %6 : vector<8x128xf32>
    %89 = arith.addf %87, %88 : vector<8x128xf32>
    %90 = arith.mulf %78, %7 : vector<8x128xf32>
    %91 = arith.mulf %75, %6 : vector<8x128xf32>
    %92 = arith.subf %90, %91 : vector<8x128xf32>
    %93 = vector.extract_strided_slice %1 {offsets = [0, 6], sizes = [8, 1], strides = [1, 1]} : vector<8x10xf32> to vector<8x1xf32>
    %94 = vector.broadcast %93 : vector<8x1xf32> to vector<8x128xf32>
    %95 = arith.mulf %89, %94 : vector<8x128xf32>
    %96 = arith.addf %86, %95 : vector<8x128xf32>
    %97 = vector.extract_strided_slice %2 {offsets = [0, 6], sizes = [8, 1], strides = [1, 1]} : vector<8x10xf32> to vector<8x1xf32>
    %98 = vector.broadcast %97 : vector<8x1xf32> to vector<8x128xf32>
    %99 = arith.mulf %92, %98 : vector<8x128xf32>
    %100 = arith.addf %96, %99 : vector<8x128xf32>
    %101 = arith.mulf %89, %7 : vector<8x128xf32>
    %102 = arith.mulf %92, %6 : vector<8x128xf32>
    %103 = arith.addf %101, %102 : vector<8x128xf32>
    %104 = arith.mulf %92, %7 : vector<8x128xf32>
    %105 = arith.mulf %89, %6 : vector<8x128xf32>
    %106 = arith.subf %104, %105 : vector<8x128xf32>
    %107 = vector.extract_strided_slice %1 {offsets = [0, 7], sizes = [8, 1], strides = [1, 1]} : vector<8x10xf32> to vector<8x1xf32>
    %108 = vector.broadcast %107 : vector<8x1xf32> to vector<8x128xf32>
    %109 = arith.mulf %103, %108 : vector<8x128xf32>
    %110 = arith.addf %100, %109 : vector<8x128xf32>
    %111 = vector.extract_strided_slice %2 {offsets = [0, 7], sizes = [8, 1], strides = [1, 1]} : vector<8x10xf32> to vector<8x1xf32>
    %112 = vector.broadcast %111 : vector<8x1xf32> to vector<8x128xf32>
    %113 = arith.mulf %106, %112 : vector<8x128xf32>
    %114 = arith.addf %110, %113 : vector<8x128xf32>
    %115 = arith.mulf %103, %7 : vector<8x128xf32>
    %116 = arith.mulf %106, %6 : vector<8x128xf32>
    %117 = arith.addf %115, %116 : vector<8x128xf32>
    %118 = arith.mulf %106, %7 : vector<8x128xf32>
    %119 = arith.mulf %103, %6 : vector<8x128xf32>
    %120 = arith.subf %118, %119 : vector<8x128xf32>
    %121 = vector.extract_strided_slice %1 {offsets = [0, 8], sizes = [8, 1], strides = [1, 1]} : vector<8x10xf32> to vector<8x1xf32>
    %122 = vector.broadcast %121 : vector<8x1xf32> to vector<8x128xf32>
    %123 = arith.mulf %117, %122 : vector<8x128xf32>
    %124 = arith.addf %114, %123 : vector<8x128xf32>
    %125 = vector.extract_strided_slice %2 {offsets = [0, 8], sizes = [8, 1], strides = [1, 1]} : vector<8x10xf32> to vector<8x1xf32>
    %126 = vector.broadcast %125 : vector<8x1xf32> to vector<8x128xf32>
    %127 = arith.mulf %120, %126 : vector<8x128xf32>
    %128 = arith.addf %124, %127 : vector<8x128xf32>
    %129 = arith.mulf %117, %7 : vector<8x128xf32>
    %130 = arith.mulf %120, %6 : vector<8x128xf32>
    %131 = arith.addf %129, %130 : vector<8x128xf32>
    %132 = arith.mulf %120, %7 : vector<8x128xf32>
    %133 = arith.mulf %117, %6 : vector<8x128xf32>
    %134 = arith.subf %132, %133 : vector<8x128xf32>
    %135 = vector.extract_strided_slice %1 {offsets = [0, 9], sizes = [8, 1], strides = [1, 1]} : vector<8x10xf32> to vector<8x1xf32>
    %136 = vector.broadcast %135 : vector<8x1xf32> to vector<8x128xf32>
    %137 = arith.mulf %131, %136 : vector<8x128xf32>
    %138 = arith.addf %128, %137 : vector<8x128xf32>
    %139 = vector.extract_strided_slice %2 {offsets = [0, 9], sizes = [8, 1], strides = [1, 1]} : vector<8x10xf32> to vector<8x1xf32>
    %140 = vector.broadcast %139 : vector<8x1xf32> to vector<8x128xf32>
    %141 = arith.mulf %134, %140 : vector<8x128xf32>
    %142 = arith.addf %138, %141 : vector<8x128xf32>
    %c0_7 = arith.constant 0 : index
    %c0_8 = arith.constant 0 : index
    %143 = vector.load %arg5[%c0_7, %c0_8] : memref<8x128xf32, #tpu.memory_space<vmem>>, vector<8x128xf32>
    tpu.vector_store %arg5[%c0_7, %c0_8], %142 {strides = array<i32>} : memref<8x128xf32, #tpu.memory_space<vmem>>, vector<8x128xf32>,
    return
  }
  func.func @transform_0(%arg0: i32) -> (i32, i32) {
    %c0_i32 = arith.constant 0 : i32
    %c0_i32_0 = arith.constant 0 : i32
    return %c0_i32, %arg0 : i32, i32
  }
  func.func @transform_1(%arg0: i32) -> (i32, i32) {
    %c0_i32 = arith.constant 0 : i32
    %c0_i32_0 = arith.constant 0 : i32
    %c0_i32_1 = arith.constant 0 : i32
    return %c0_i32, %c0_i32_0 : i32, i32
  }
  func.func @transform_2(%arg0: i32) -> (i32, i32) {
    %c0_i32 = arith.constant 0 : i32
    %c0_i32_0 = arith.constant 0 : i32
    %c0_i32_1 = arith.constant 0 : i32
    return %c0_i32, %c0_i32_0 : i32, i32
  }
  func.func @transform_3(%arg0: i32) -> (i32, i32) {
    %c0_i32 = arith.constant 0 : i32
    %c0_i32_0 = arith.constant 0 : i32
    %c0_i32_1 = arith.constant 0 : i32
    return %c0_i32, %c0_i32_0 : i32, i32
  }
  func.func @transform_4(%arg0: i32) -> (i32, i32) {
    %c0_i32 = arith.constant 0 : i32
    %c0_i32_0 = arith.constant 0 : i32
    return %c0_i32, %arg0 : i32, i32
  }
}

</mosaic_0001>

<llo_original>
// kernel: tpu_custom_call.1
$region0: #{tpu_custom_call.1}
  #allocation0 [shape = 'u32[]', space=smem, size = 0x4, offset = 0x4, fixed_abs, tag = 'smem constant byte address 0x4 - core index']
  #allocation1 [shape = 'u32[144,128]{1,0:T(1,128)}', space=vmem, size = 0x12000, scoped, tag = 'internal scratch']
  %s0 = inlined_call_operand.vmem [shape: f32[8,128], index: 0, kind: input, shape index: {}]
  %s1 = inlined_call_operand.hbm [shape: f32[8,10], index: 1, kind: input, shape index: {}]
  %s2 = inlined_call_operand.vmem [shape: f32[8,10], index: 2, kind: input, shape index: {}]
  %s3 = inlined_call_operand.vmem [shape: f32[8,1], index: 3, kind: input, shape index: {}]
  %s4 = inlined_call_operand.hbm [shape: f32[8,128], index: 4, kind: output, shape index: {}]
  %s5 = sld [smem:[#allocation0]]
  $region30: #{tpu_custom_call.1} parent=0
    _
  %s7 = ssub.s32 1, %s5
  %s8 = scalar_select 0, %s7, %s5
  $region1: #{tpu_custom_call.1} parent=0
    #allocation2 [shape = 'u8[4096]{0}', space=vmem, size = 0x1000, scoped, tag = 'input window, operand 1, single buffered']
    #allocation3 [shape = 's32[1]{0}', space=sflag, size = 0x4, scoped, tag = 'scoped memory for tpu_custom_call.1']
    #allocation4 [shape = 's32[1]{0}', space=sflag, size = 0x4, scoped, tag = 'scoped memory for tpu_custom_call.1']
    #allocation5 [shape = 'u8[4096]{0}', space=vmem, size = 0x1000, scoped, tag = 'output window, operand 0, single buffered']
    %9 = vsyncpa [#allocation3], 0
    %10 = vsyncpa [#allocation4], 0
    // Predicated region
    $region2: #{tpu_custom_call.1} parent=1 // pred_check
      _
    $region3: #{tpu_custom_call.1} parent=1 // pred_check_branch
      %12 = sbr.rel (0) target = $region5
    $region4: #{tpu_custom_call.1} parent=1 // pred_region
      _
    $region5: #{tpu_custom_call.1} parent=1 // pred_fallthru
      _
    // Predicated region
    $region6: #{tpu_custom_call.1} parent=1 // pred_check
      _
    $region7: #{tpu_custom_call.1} parent=1 // pred_check_branch
      %14 = sbr.rel (0) target = $region9
    $region8: #{tpu_custom_call.1} parent=1 // pred_region
      %s16 = ssub.s32 128, 128
      %17 = vsyncadd [#allocation3], %s16
      %s19 = sshll.u32 [#allocation2], 4
      %s20 = int_to_ptr.vmem [resolvable:$true] %s19
      %22 = dma.hbm_to_vmem [thread:$0]  %s1, 128, %s20, [#allocation3]
    $region9: #{tpu_custom_call.1} parent=1 // pred_fallthru
      _
    // Predicated region
    $region10: #{tpu_custom_call.1} parent=1 // pred_check
      _
    $region11: #{tpu_custom_call.1} parent=1 // pred_check_branch
      %24 = sbr.rel (0) target = $region13
    $region12: #{tpu_custom_call.1} parent=1 // pred_region
      _
    $region13: #{tpu_custom_call.1} parent=1 // pred_fallthru
      _
    // Predicated region
    $region14: #{tpu_custom_call.1} parent=1 // pred_check
      _
    $region15: #{tpu_custom_call.1} parent=1 // pred_check_branch
      %26 = sbr.rel (0) target = $region17
    $region16: #{tpu_custom_call.1} parent=1 // pred_region
      _
    $region17: #{tpu_custom_call.1} parent=1 // pred_fallthru
      _
    // Predicated region
    $region18: #{tpu_custom_call.1} parent=1 // pred_check
      _
    $region19: #{tpu_custom_call.1} parent=1 // pred_check_branch
      %28 = sbr.rel (0) target = $region21
    $region20: #{tpu_custom_call.1} parent=1 // pred_region
      %29 = dma.done [#allocation3], 128
    $region21: #{tpu_custom_call.1} parent=1 // pred_fallthru
      _
    %v30 = vld [vmem:[%s0] sm:$0xff]
    %v31 = vld [vmem:[#allocation2] sm:$0xff]
    %v32 = vld [vmem:[%s2] sm:$0xff]
    %v33 = vld [vmem:[%s3] sm:$0xff]
    %v34 = vmul.f32 %v30, 3.1415927
    %v35 = vand.u32 2147483647, %v34
    %vm36 = vcmp.le.f32.partialorder %v35, 0.7853982
    %vm37 = vcmp.lt.s32.totalorder %v34, 0
    %v38 = vand.u32 %v34, 2139095040
    %v39 = vshrl.u32 %v38, 23
    %v40 = vsub.s32 %v39, 127
    %v41 = vand.u32 2147483647, %v34
    %v42 = vand.u32 %v41, 8388607
    %v43 = vor.u32 %v42, 8388608
    %v44 = vsub.s32 0, %v43
    %v45 = vadd.s32 %v40, 1
    %vm46 = vcmp.gt.s32.totalorder %v45, 0
    %v47 = vsel %vm46, %v45, 0
    %v48 = vshrl.u32 %v47, 5
    %v49 = vand.u32 %v47, 31
    %v50 = vsub.s32 32, %v49
    %v51 = vshrl.u32 683565275, %v50
    %v52 = vshll.u32 683565275, %v49
    %v53 = vshrl.u32 2475754826, %v50
    %v54 = vor.u32 %v52, %v53
    %v55 = vshll.u32 2475754826, %v49
    %v56 = vshrl.u32 2131351028, %v50
    %v57 = vor.u32 %v55, %v56
    %v58 = vshll.u32 2131351028, %v49
    %v59 = vshrl.u32 2102212464, %v50
    %v60 = vor.u32 %v58, %v59
    %v61 = vshll.u32 2102212464, %v49
    %v62 = vshrl.u32 920167782, %v50
    %v63 = vor.u32 %v61, %v62
    %v64 = vshll.u32 920167782, %v49
    %v65 = vshrl.u32 1326507024, %v50
    %v66 = vor.u32 %v64, %v65
    %vm67 = vcmp.lt.s32.totalorder %v48, 1
    %vm68 = vcmp.lt.s32.totalorder %v48, 2
    %vm69 = vcmp.lt.s32.totalorder %v48, 3
    %vm70 = vcmp.lt.s32.totalorder %v48, 4
    %v71 = vsel %vm67, %v51, %v54
    %v72 = vsel %vm70, %v60, 2102212464
    %v73 = vsel %vm69, %v57, %v72
    %v74 = vsel %vm68, %v71, %v73
    %v75 = vsel %vm67, %v54, %v57
    %v76 = vsel %vm70, %v63, 920167782
    %v77 = vsel %vm69, %v60, %v76
    %v78 = vsel %vm68, %v75, %v77
    %v79 = vsel %vm67, %v57, %v60
    %v80 = vsel %vm70, %v66, 1326507024
    %v81 = vsel %vm69, %v63, %v80
    %v82 = vsel %vm68, %v79, %v81
    %v83 = vshll.u32 %v43, 8
    %v84 = vmul.u32.u64.compose %v83, %v82
    %v85 = vextract.low.u32 %v84
    %v86 = vextract.high.u32 %v84
    %v87 = vmul.u32.u64.compose %v83, %v78
    %v88 = vextract.low.u32 %v87
    %v89 = vextract.high.u32 %v87
    %v90 = vmul.u32 %v83, %v74
    %v91 = vadd.s32 %v86, %v88
    %vm92 = vc.u32 %v86, %v88
    %v93 = vadd.s32 %v89, 1
    %v94 = vsel %vm92, %v93, %v89
    %v95 = vadd.s32 %v90, %v94
    %v96 = vadd.s32 %v95, 536870912
    %v97 = vshrl.u32 %v96, 30
    %v98 = vshll.u32 %v97, 30
    %v99 = vsub.s32 %v95, %v98
    %vm100 = vcmp.lt.s32.totalorder %v99, 0
    %v101 = vsub.s32 0, %v99
    %v102 = vsel %vm100, %v101, %v99
    %v103 = vclz %v102
    %v104 = vsub.s32 %v103, 2
    %vm105 = vcmp.gt.s32.totalorder 0, %v104
    %v106 = vsel %vm105, 0, %v104
    %v107 = vsub.s32 32, %v106
    %v108 = vshll.u32 %v99, %v106
    %v109 = vshrl.u32 %v91, %v107
    %v110 = vor.u32 %v108, %v109
    %v111 = vsub.s32 4294967266, %v106
    %v112 = vadd.s32 %v111, 127
    %v113 = vshll.u32 %v112, 23
    %v114 = vor.u32 4788187, %v113
    %v115 = vand.u32 2147483647, %v114
    %v117 = vcvt.s32.f32 %v110
    %v118 = vmul.f32 %v117, %v115
    %v119 = vxor.u32 %v118, 2147483648
    %v120 = vsel %vm37, %v119, %v118
    %v121 = vsub.s32 4, %v97
    %v122 = vsel %vm37, %v121, %v97
    %v123 = vsel %vm36, %v34, %v120
    %v124 = vsel %vm36, 0, %v122
    %v125 = vcosq.f32.pop %v123
    %v126 = vsinq.f32.pop %v123
    %vm127 = vweird.f32 %v34
    %v128 = vadd.s32 %v124, 3
    %v129 = vand.u32 %v128, 3
    %vm130 = vcmp.lt.s32.totalorder %v129, 2
    %vm131 = vcmp.eq.s32.totalorder %v129, 0
    %v132 = vxor.u32 %v126, 2147483648
    %v133 = vsel %vm131, %v125, %v132
    %vm134 = vcmp.eq.s32.totalorder %v129, 2
    %v135 = vxor.u32 %v125, 2147483648
    %v136 = vsel %vm134, %v135, %v126
    %v137 = vsel %vm130, %v133, %v136
    %v138 = vsel %vm127, nan, %v137
    %v139 = vand.u32 2147483647, %v34
    %vm140 = vcmp.le.f32.partialorder %v139, 0.7853982
    %vm141 = vcmp.lt.s32.totalorder %v34, 0
    %v142 = vand.u32 %v34, 2139095040
    %v143 = vshrl.u32 %v142, 23
    %v144 = vsub.s32 %v143, 127
    %v145 = vand.u32 2147483647, %v34
    %v146 = vand.u32 %v145, 8388607
    %v147 = vor.u32 %v146, 8388608
    %v148 = vsub.s32 0, %v147
    %v149 = vadd.s32 %v144, 1
    %vm150 = vcmp.gt.s32.totalorder %v149, 0
    %v151 = vsel %vm150, %v149, 0
    %v152 = vshrl.u32 %v151, 5
    %v153 = vand.u32 %v151, 31
    %v154 = vsub.s32 32, %v153
    %v155 = vshrl.u32 683565275, %v154
    %v156 = vshll.u32 683565275, %v153
    %v157 = vshrl.u32 2475754826, %v154
    %v158 = vor.u32 %v156, %v157
    %v159 = vshll.u32 2475754826, %v153
    %v160 = vshrl.u32 2131351028, %v154
    %v161 = vor.u32 %v159, %v160
    %v162 = vshll.u32 2131351028, %v153
    %v163 = vshrl.u32 2102212464, %v154
    %v164 = vor.u32 %v162, %v163
    %v165 = vshll.u32 2102212464, %v153
    %v166 = vshrl.u32 920167782, %v154
    %v167 = vor.u32 %v165, %v166
    %v168 = vshll.u32 920167782, %v153
    %v169 = vshrl.u32 1326507024, %v154
    %v170 = vor.u32 %v168, %v169
    %vm171 = vcmp.lt.s32.totalorder %v152, 1
    %vm172 = vcmp.lt.s32.totalorder %v152, 2
    %vm173 = vcmp.lt.s32.totalorder %v152, 3
    %vm174 = vcmp.lt.s32.totalorder %v152, 4
    %v175 = vsel %vm171, %v155, %v158
    %v176 = vsel %vm174, %v164, 2102212464
    %v177 = vsel %vm173, %v161, %v176
    %v178 = vsel %vm172, %v175, %v177
    %v179 = vsel %vm171, %v158, %v161
    %v180 = vsel %vm174, %v167, 920167782
    %v181 = vsel %vm173, %v164, %v180
    %v182 = vsel %vm172, %v179, %v181
    %v183 = vsel %vm171, %v161, %v164
    %v184 = vsel %vm174, %v170, 1326507024
    %v185 = vsel %vm173, %v167, %v184
    %v186 = vsel %vm172, %v183, %v185
    %v187 = vshll.u32 %v147, 8
    %v188 = vmul.u32.u64.compose %v187, %v186
    %v189 = vextract.low.u32 %v188
    %v190 = vextract.high.u32 %v188
    %v191 = vmul.u32.u64.compose %v187, %v182
    %v192 = vextract.low.u32 %v191
    %v193 = vextract.high.u32 %v191
    %v194 = vmul.u32 %v187, %v178
    %v195 = vadd.s32 %v190, %v192
    %vm196 = vc.u32 %v190, %v192
    %v197 = vadd.s32 %v193, 1
    %v198 = vsel %vm196, %v197, %v193
    %v199 = vadd.s32 %v194, %v198
    %v200 = vadd.s32 %v199, 536870912
    %v201 = vshrl.u32 %v200, 30
    %v202 = vshll.u32 %v201, 30
    %v203 = vsub.s32 %v199, %v202
    %vm204 = vcmp.lt.s32.totalorder %v203, 0
    %v205 = vsub.s32 0, %v203
    %v206 = vsel %vm204, %v205, %v203
    %v207 = vclz %v206
    %v208 = vsub.s32 %v207, 2
    %vm209 = vcmp.gt.s32.totalorder 0, %v208
    %v210 = vsel %vm209, 0, %v208
    %v211 = vsub.s32 32, %v210
    %v212 = vshll.u32 %v203, %v210
    %v213 = vshrl.u32 %v195, %v211
    %v214 = vor.u32 %v212, %v213
    %v215 = vsub.s32 4294967266, %v210
    %v216 = vadd.s32 %v215, 127
    %v217 = vshll.u32 %v216, 23
    %v218 = vor.u32 4788187, %v217
    %v219 = vand.u32 2147483647, %v218
    %v221 = vcvt.s32.f32 %v214
    %v222 = vmul.f32 %v221, %v219
    %v223 = vxor.u32 %v222, 2147483648
    %v224 = vsel %vm141, %v223, %v222
    %v225 = vsub.s32 4, %v201
    %v226 = vsel %vm141, %v225, %v201
    %v227 = vsel %vm140, %v34, %v224
    %v228 = vsel %vm140, 0, %v226
    %v229 = vcosq.f32.pop %v227
    %v230 = vsinq.f32.pop %v227
    %vm231 = vweird.f32 %v34
    %v232 = vand.u32 %v228, 3
    %vm233 = vcmp.lt.s32.totalorder %v232, 2
    %vm234 = vcmp.eq.s32.totalorder %v232, 0
    %v235 = vxor.u32 %v230, 2147483648
    %v236 = vsel %vm234, %v229, %v235
    %vm237 = vcmp.eq.s32.totalorder %v232, 2
    %v238 = vxor.u32 %v229, 2147483648
    %v239 = vsel %vm237, %v238, %v230
    %v240 = vsel %vm233, %v236, %v239
    %v241 = vsel %vm231, nan, %v240
    %243 = vset.pattern.permute.xlu0 0
    %244 = vperm.xlu0 %243, %v31
    %v245 = vpop.permute.xlu0 %244
    %v247 = vmul.f32 %v138, %v245
    %249 = vset.pattern.permute.xlu0 0
    %250 = vperm.xlu0 %249, %v33
    %v251 = vpop.permute.xlu0 %250
    %v253 = vadd.f32 %v251, %v247
    %255 = vset.pattern.permute.xlu0 0
    %256 = vperm.xlu0 %255, %v32
    %v257 = vpop.permute.xlu0 %256
    %v259 = vmul.f32 %v241, %v257
    %v260 = vadd.f32 %v253, %v259
    %v261 = vmul.f32 %v138, %v241
    %v262 = vadd.f32 %v261, %v261
    %v263 = vmul.f32 %v241, %v241
    %v264 = vmul.f32 %v138, %v138
    %v265 = vsub.f32 %v263, %v264
    %266 = vset.pattern.permute.xlu0 1
    %267 = vperm.xlu0 %266, %v31
    %v268 = vpop.permute.xlu0 %267
    %v270 = vmul.f32 %v262, %v268
    %v271 = vadd.f32 %v260, %v270
    %272 = vset.pattern.permute.xlu0 1
    %273 = vperm.xlu0 %272, %v32
    %v274 = vpop.permute.xlu0 %273
    %v276 = vmul.f32 %v265, %v274
    %v277 = vadd.f32 %v271, %v276
    %v278 = vmul.f32 %v262, %v241
    %v279 = vmul.f32 %v265, %v138
    %v280 = vadd.f32 %v278, %v279
    %v281 = vmul.f32 %v265, %v241
    %v282 = vmul.f32 %v262, %v138
    %v283 = vsub.f32 %v281, %v282
    %284 = vset.pattern.permute.xlu0 2
    %285 = vperm.xlu0 %284, %v31
    %v286 = vpop.permute.xlu0 %285
    %v288 = vmul.f32 %v280, %v286
    %v289 = vadd.f32 %v277, %v288
    %290 = vset.pattern.permute.xlu0 2
    %291 = vperm.xlu0 %290, %v32
    %v292 = vpop.permute.xlu0 %291
    %v294 = vmul.f32 %v283, %v292
    %v295 = vadd.f32 %v289, %v294
    %v296 = vmul.f32 %v280, %v241
    %v297 = vmul.f32 %v283, %v138
    %v298 = vadd.f32 %v296, %v297
    %v299 = vmul.f32 %v283, %v241
    %v300 = vmul.f32 %v280, %v138
    %v301 = vsub.f32 %v299, %v300
    %302 = vset.pattern.permute.xlu0 3
    %303 = vperm.xlu0 %302, %v31
    %v304 = vpop.permute.xlu0 %303
    %v306 = vmul.f32 %v298, %v304
    %v307 = vadd.f32 %v295, %v306
    %308 = vset.pattern.permute.xlu0 3
    %309 = vperm.xlu0 %308, %v32
    %v310 = vpop.permute.xlu0 %309
    %v312 = vmul.f32 %v301, %v310
    %v313 = vadd.f32 %v307, %v312
    %v314 = vmul.f32 %v298, %v241
    %v315 = vmul.f32 %v301, %v138
    %v316 = vadd.f32 %v314, %v315
    %v317 = vmul.f32 %v301, %v241
    %v318 = vmul.f32 %v298, %v138
    %v319 = vsub.f32 %v317, %v318
    %320 = vset.pattern.permute.xlu0 4
    %321 = vperm.xlu0 %320, %v31
    %v322 = vpop.permute.xlu0 %321
    %v324 = vmul.f32 %v316, %v322
    %v325 = vadd.f32 %v313, %v324
    %326 = vset.pattern.permute.xlu0 4
    %327 = vperm.xlu0 %326, %v32
    %v328 = vpop.permute.xlu0 %327
    %v330 = vmul.f32 %v319, %v328
    %v331 = vadd.f32 %v325, %v330
    %v332 = vmul.f32 %v316, %v241
    %v333 = vmul.f32 %v319, %v138
    %v334 = vadd.f32 %v332, %v333
    %v335 = vmul.f32 %v319, %v241
    %v336 = vmul.f32 %v316, %v138
    %v337 = vsub.f32 %v335, %v336
    %338 = vset.pattern.permute.xlu0 5
    %339 = vperm.xlu0 %338, %v31
    %v340 = vpop.permute.xlu0 %339
    %v342 = vmul.f32 %v334, %v340
    %v343 = vadd.f32 %v331, %v342
    %344 = vset.pattern.permute.xlu0 5
    %345 = vperm.xlu0 %344, %v32
    %v346 = vpop.permute.xlu0 %345
    %v348 = vmul.f32 %v337, %v346
    %v349 = vadd.f32 %v343, %v348
    %v350 = vmul.f32 %v334, %v241
    %v351 = vmul.f32 %v337, %v138
    %v352 = vadd.f32 %v350, %v351
    %v353 = vmul.f32 %v337, %v241
    %v354 = vmul.f32 %v334, %v138
    %v355 = vsub.f32 %v353, %v354
    %356 = vset.pattern.permute.xlu0 6
    %357 = vperm.xlu0 %356, %v31
    %v358 = vpop.permute.xlu0 %357
    %v360 = vmul.f32 %v352, %v358
    %v361 = vadd.f32 %v349, %v360
    %362 = vset.pattern.permute.xlu0 6
    %363 = vperm.xlu0 %362, %v32
    %v364 = vpop.permute.xlu0 %363
    %v366 = vmul.f32 %v355, %v364
    %v367 = vadd.f32 %v361, %v366
    %v368 = vmul.f32 %v352, %v241
    %v369 = vmul.f32 %v355, %v138
    %v370 = vadd.f32 %v368, %v369
    %v371 = vmul.f32 %v355, %v241
    %v372 = vmul.f32 %v352, %v138
    %v373 = vsub.f32 %v371, %v372
    %374 = vset.pattern.permute.xlu0 7
    %375 = vperm.xlu0 %374, %v31
    %v376 = vpop.permute.xlu0 %375
    %v378 = vmul.f32 %v370, %v376
    %v379 = vadd.f32 %v367, %v378
    %380 = vset.pattern.permute.xlu0 7
    %381 = vperm.xlu0 %380, %v32
    %v382 = vpop.permute.xlu0 %381
    %v384 = vmul.f32 %v373, %v382
    %v385 = vadd.f32 %v379, %v384
    %v386 = vmul.f32 %v370, %v241
    %v387 = vmul.f32 %v373, %v138
    %v388 = vadd.f32 %v386, %v387
    %v389 = vmul.f32 %v373, %v241
    %v390 = vmul.f32 %v370, %v138
    %v391 = vsub.f32 %v389, %v390
    %392 = vset.pattern.permute.xlu0 8
    %393 = vperm.xlu0 %392, %v31
    %v394 = vpop.permute.xlu0 %393
    %v396 = vmul.f32 %v388, %v394
    %v397 = vadd.f32 %v385, %v396
    %398 = vset.pattern.permute.xlu0 8
    %399 = vperm.xlu0 %398, %v32
    %v400 = vpop.permute.xlu0 %399
    %v402 = vmul.f32 %v391, %v400
    %v403 = vadd.f32 %v397, %v402
    %v404 = vmul.f32 %v388, %v241
    %v405 = vmul.f32 %v391, %v138
    %v406 = vadd.f32 %v404, %v405
    %v407 = vmul.f32 %v391, %v241
    %v408 = vmul.f32 %v388, %v138
    %v409 = vsub.f32 %v407, %v408
    %410 = vset.pattern.permute.xlu0 9
    %411 = vperm.xlu0 %410, %v31
    %v412 = vpop.permute.xlu0 %411
    %v414 = vmul.f32 %v406, %v412
    %v415 = vadd.f32 %v403, %v414
    %416 = vset.pattern.permute.xlu0 9
    %417 = vperm.xlu0 %416, %v32
    %v418 = vpop.permute.xlu0 %417
    %v420 = vmul.f32 %v409, %v418
    %v421 = vadd.f32 %v415, %v420
    %422 = vst [vmem:[#allocation5] sm:$0xff] %v421
    // Predicated region
    $region22: #{tpu_custom_call.1} parent=1 // pred_check
      _
    $region23: #{tpu_custom_call.1} parent=1 // pred_check_branch
      %424 = sbr.rel (0) target = $region25
    $region24: #{tpu_custom_call.1} parent=1 // pred_region
      %s426 = ssub.s32 128, 128
      %427 = vsyncadd [#allocation4], %s426
      %s429 = sshll.u32 [#allocation5], 4
      %s430 = int_to_ptr.vmem [resolvable:$true] %s429
      %432 = dma.vmem_to_hbm [thread:$0]  %s430, 128, %s4, [#allocation4]
    $region25: #{tpu_custom_call.1} parent=1 // pred_fallthru
      _
    // Predicated region
    $region26: #{tpu_custom_call.1} parent=1 // pred_check
      _
    $region27: #{tpu_custom_call.1} parent=1 // pred_check_branch
      %434 = sbr.rel (0) target = $region29
    $region28: #{tpu_custom_call.1} parent=1 // pred_region
      %435 = dma.done [#allocation4], 128
    $region29: #{tpu_custom_call.1} parent=1 // pred_fallthru
      _
    %436 = vsyncpa [#allocation3], 1
    %437 = vsyncpa [#allocation4], 1

</llo_original>
